<compile_context>
chip_gen: v5e
topology: v5e:2x2
jax: 0.10.0
libtpu: 0.0.40
codegen_flags: <defaults>
</compile_context>

<pallas_src>
import functools

import jax
import jax.numpy as jnp
from jax.experimental import pallas as pl
from jax.experimental.pallas import tpu as pltpu


def cbam_kernel(x_ref, w1t_ref, w2_ref, wp_ref, o_ref, *, W, K):
    # x_ref : (Bb, C, HW)   VMEM  (channels on sublanes, pixels lane-dense)
    # w1t_ref: (C, Cr)      VMEM  (fc1 weight, transposed)
    # w2_ref : (C, Cr)      VMEM  (fc2 weight)
    # wp_ref : (K, 2K, HW)  VMEM  (per-tap conv weights with pad-mask folded in;
    #                              row 2*kh+0 = mean channel, 2*kh+1 = max channel)
    # o_ref : (Bb, C, HW)   VMEM
    R = K // 2

    x = x_ref[...].astype(jnp.float32)                     # (Bb, C, HW)

    # ---------------- channel attention (VPU/XLU, no MXU round-trip) --------
    avg = jnp.mean(x, axis=2, keepdims=True)               # (Bb, C, 1)
    mx = jnp.max(x, axis=2, keepdims=True)                 # (Bb, C, 1)

    w1t = w1t_ref[...].astype(jnp.float32)[None]           # (1, C, Cr)
    w2 = w2_ref[...].astype(jnp.float32)[None]             # (1, C, Cr)

    # fc1: sublane reduce over C; fc2: lane reduce over Cr (tiny).
    h_avg = jnp.maximum(jnp.sum(w1t * avg, axis=1, keepdims=True), 0.0)  # (Bb,1,Cr)
    h_max = jnp.maximum(jnp.sum(w1t * mx, axis=1, keepdims=True), 0.0)
    o_avg = jnp.sum(w2 * h_avg, axis=2, keepdims=True)     # (Bb, C, 1)
    o_max = jnp.sum(w2 * h_max, axis=2, keepdims=True)
    ch_att = jax.nn.sigmoid(o_avg + o_max)                 # (Bb, C, 1)

    xs = x * ch_att                                        # (Bb, C, HW)
    # Park xs in the output block so it need not stay live across the conv loop.
    o_ref[...] = xs.astype(o_ref.dtype)

    # ---------------- spatial attention ----------------
    mean_map = jnp.mean(xs, axis=1, keepdims=True)         # (Bb, 1, HW)
    max_map = jnp.max(xs, axis=1, keepdims=True)           # (Bb, 1, HW)
    maps = jnp.concatenate([mean_map, max_map], axis=1)    # (Bb, 2, HW)

    def _roll(a, s):
        return a if s == 0 else jnp.roll(a, s, axis=2)

    # Sublane-packed stack of the K row-shifted [mean, max] pairs.
    # Row 2*kh+j of S holds maps[:, j, :] shifted so pixel p sees source
    # (h + kh - R, w).  Circular wraparound only lands on positions whose
    # folded weight (mask) is zero, so it never pollutes the result.
    S = jnp.concatenate([_roll(maps, (R - kh) * W) for kh in range(K)],
                        axis=1)                            # (Bb, 2K, HW)

    # 7x7 "same" conv as 7 full-vreg lane rolls + 7 MACs with mask-folded
    # weight planes, then one sublane reduction over the 2K packed rows.
    acc = jnp.zeros(S.shape, jnp.float32)                  # (Bb, 2K, HW)
    for kw in range(K):
        skw = _roll(S, R - kw)
        acc = acc + wp_ref[kw][None] * skw                 # (1,2K,HW)*(Bb,2K,HW)
    conv = jnp.sum(acc, axis=1, keepdims=True)             # (Bb, 1, HW)
    s_att = jax.nn.sigmoid(conv)

    o_ref[...] = (o_ref[...].astype(jnp.float32) * s_att).astype(o_ref.dtype)


def _pick_batch_block(B, C, HW, dtype_bytes=4, target_bytes=1 << 20):
    """Largest divisor of B giving ~target-sized blocks, grid >= 2 when B >= 2."""
    per_image = max(C * HW * dtype_bytes, 1)
    bb = max(1, min(B, target_bytes // per_image))
    if B >= 2:                       # keep both v7x TensorCores busy
        bb = min(bb, max(B // 2, 1))
    while B % bb:
        bb -= 1
    return bb


def _masked_weight_planes(w_conv, H, W):
    """(K, 2K, HW) per-tap 7x7 conv weights with the zero-pad mask folded in."""
    K = w_conv.shape[-1]
    R = K // 2
    HW = H * W
    idx = jnp.arange(HW, dtype=jnp.int32)
    row = idx // W
    col = idx % W
    planes = []
    for kw in range(K):
        rows = []
        for kh in range(K):
            dh, dw = kh - R, kw - R
            mask = ((row + dh >= 0) & (row + dh < H)
                    & (col + dw >= 0) & (col + dw < W)).astype(jnp.float32)
            rows.append(w_conv[0, 0, kh, kw] * mask)   # mean-map channel
            rows.append(w_conv[0, 1, kh, kw] * mask)   # max-map channel
        planes.append(jnp.stack(rows, axis=0))          # (2K, HW)
    return jnp.stack(planes, axis=0)                    # (K, 2K, HW)


@jax.jit
def cbam_forward(x_nchw, w1, w2, w_conv):
    """CBAM forward.  x_nchw: (B, C, H, W) f32.  Returns (B, C, H, W)."""
    B, C, H, W = x_nchw.shape
    HW = H * W
    Cr = w1.shape[0]
    K = w_conv.shape[-1]

    # Lane-dense output guard (HW=256 today -> unmasked full-lane stores).
    # TODO(synk): pad HW to the next multiple of 128 + in-kernel mask if reused
    # with H*W not divisible by 128.
    assert HW % 128 == 0, "H*W must be a multiple of 128 for this kernel"

    x2 = x_nchw.reshape(B, C, HW)              # contiguous, free reshape
    w1t = jnp.transpose(w1)                    # (C, Cr) for the VPU MLP
    wp = _masked_weight_planes(w_conv, H, W)   # (K, 2K, HW), batch-invariant

    Bb = _pick_batch_block(B, C, HW)
    grid = B // Bb

    # VMEM budget: double-buffered in+out blocks + weight planes, with headroom;
    # floored at 16 MiB (v5e scoped default), capped below v7x's 64 MiB physical.
    block_bytes = Bb * C * HW * 4
    needed = 4 * block_bytes + 2 * wp.size * 4 + 4 * (w1.size + w2.size) * 4
    vmem_limit = int(min(max(4 * needed, 16 << 20), 48 << 20))

    kernel = functools.partial(cbam_kernel, W=W, K=K)
    out = pl.pallas_call(
        kernel,
        out_shape=jax.ShapeDtypeStruct((B, C, HW), x_nchw.dtype),
        grid_spec=pltpu.PrefetchScalarGridSpec(
            num_scalar_prefetch=0,
            grid=(grid,),
            in_specs=[
                pl.BlockSpec((Bb, C, HW), lambda b: (b, 0, 0)),
                pl.BlockSpec((C, Cr), lambda b: (0, 0)),
                pl.BlockSpec((C, Cr), lambda b: (0, 0)),
                pl.BlockSpec((K, 2 * K, HW), lambda b: (0, 0, 0)),
            ],
            out_specs=pl.BlockSpec((Bb, C, HW), lambda b: (b, 0, 0)),
        ),
        compiler_params=pltpu.CompilerParams(
            dimension_semantics=("parallel",),
            vmem_limit_bytes=vmem_limit),
    )(x2, w1t, w2, wp)

    return out.reshape(B, C, H, W)


def cbam_reference(x, w1, w2, w_conv):
    """Pure-JAX NCHW reference matching the PyTorch module."""
    avg = jnp.mean(x, axis=(2, 3))              # (B, C)
    mx = jnp.max(x, axis=(2, 3))                # (B, C)

    def mlp(v):
        h = jnp.maximum(v @ w1.T, 0.0)
        return h @ w2.T

    ch = jax.nn.sigmoid(mlp(avg) + mlp(mx))     # (B, C)
    x = x * ch[:, :, None, None]

    mean_map = jnp.mean(x, axis=1, keepdims=True)
    max_map = jnp.max(x, axis=1, keepdims=True)
    sp_in = jnp.concatenate([mean_map, max_map], axis=1)      # (B, 2, H, W)
    conv = jax.lax.conv_general_dilated(
        sp_in, w_conv, window_strides=(1, 1), padding=((3, 3), (3, 3)),
        dimension_numbers=("NCHW", "OIHW", "NCHW"))
    return x * jax.nn.sigmoid(conv)


if __name__ == "__main__":
    B, C, H, W = 2, 32, 16, 16
    reduction = 16
    Cr = C // reduction

    key = jax.random.PRNGKey(0)
    k_x, k_w1, k_w2, k_wc = jax.random.split(key, 4)

    x = jax.random.normal(k_x, (B, C, H, W), jnp.float32)
    # Deterministic synthetic weights (same shapes as the nn.Module's params).
    w1 = jax.random.normal(k_w1, (Cr, C), jnp.float32) * 0.2          # Conv2d(C, Cr, 1)
    w2 = jax.random.normal(k_w2, (C, Cr), jnp.float32) * 0.2          # Conv2d(Cr, C, 1)
    w_conv = jax.random.normal(k_wc, (1, 2, 7, 7), jnp.float32) * 0.2  # Conv2d(2, 1, 7)

    out = cbam_forward(x, w1, w2, w_conv)
    out = jax.block_until_ready(out)

    ref = cbam_reference(x, w1, w2, w_conv)
    assert out.shape == (B, C, H, W)
    assert bool(jnp.allclose(out, ref, atol=1e-3, rtol=1e-3)), "mismatch vs reference"

    print("KERNEL_OK")
</pallas_src>

<mosaic_0001>
module attributes {stable_mosaic.version = 11 : i64} {
  func.func @cbam_kernel(%arg0: i32, %arg1: memref<1x32x256xf32, #tpu.memory_space<vmem>>, %arg2: memref<32x2xf32, #tpu.memory_space<vmem>>, %arg3: memref<32x2xf32, #tpu.memory_space<vmem>>, %arg4: memref<7x14x256xf32, #tpu.memory_space<vmem>>, %arg5: memref<1x32x256xf32, #tpu.memory_space<vmem>>) attributes {dimension_semantics = [#tpu.dimension_semantics<parallel>], iteration_bounds = array<i64: 2>, scalar_prefetch = 0 : i64, scratch_operands = 0 : i64, tpu.core_type = #tpu.core_type<tc>, window_params = [{transform_indices = @transform_0, window_bounds = array<i64: 1, 32, 256>}, {pipeline_mode = #tpu.pipeline_mode<synchronous>, transform_indices = @transform_1, window_bounds = array<i64: 32, 2>}, {pipeline_mode = #tpu.pipeline_mode<synchronous>, transform_indices = @transform_2, window_bounds = array<i64: 32, 2>}, {pipeline_mode = #tpu.pipeline_mode<synchronous>, transform_indices = @transform_3, window_bounds = array<i64: 7, 14, 256>}, {transform_indices = @transform_4, window_bounds = array<i64: 1, 32, 256>}]} {
    %c0 = arith.constant 0 : index
    %c0_0 = arith.constant 0 : index
    %c0_1 = arith.constant 0 : index
    %0 = vector.load %arg1[%c0, %c0_0, %c0_1] : memref<1x32x256xf32, #tpu.memory_space<vmem>>, vector<1x32x256xf32>
    %cst = arith.constant dense<0.000000e+00> : vector<1x32xf32>
    %1 = vector.multi_reduction <add>, %0, %cst [2] : vector<1x32x256xf32> to vector<1x32xf32>
    %2 = vector.shape_cast %1 : vector<1x32xf32> to vector<1x32x1xf32>
    %cst_2 = arith.constant 2.560000e+02 : f32
    %3 = vector.broadcast %cst_2 : f32 to vector<1x32x1xf32>
    %4 = arith.divf %2, %3 : vector<1x32x1xf32>
    %cst_3 = arith.constant dense<0xFF800000> : vector<1x32xf32>
    %5 = vector.multi_reduction <maximumf>, %0, %cst_3 [2] : vector<1x32x256xf32> to vector<1x32xf32>
    %6 = vector.shape_cast %5 : vector<1x32xf32> to vector<1x32x1xf32>
    %c0_4 = arith.constant 0 : index
    %c0_5 = arith.constant 0 : index
    %7 = vector.load %arg2[%c0_4, %c0_5] : memref<32x2xf32, #tpu.memory_space<vmem>>, vector<32x2xf32>
    %8 = vector.shape_cast %7 : vector<32x2xf32> to vector<1x32x2xf32>
    %c0_6 = arith.constant 0 : index
    %c0_7 = arith.constant 0 : index
    %9 = vector.load %arg3[%c0_6, %c0_7] : memref<32x2xf32, #tpu.memory_space<vmem>>, vector<32x2xf32>
    %10 = vector.shape_cast %9 : vector<32x2xf32> to vector<1x32x2xf32>
    %11 = vector.broadcast %4 : vector<1x32x1xf32> to vector<1x32x2xf32>
    %12 = arith.mulf %8, %11 : vector<1x32x2xf32>
    %cst_8 = arith.constant dense<0.000000e+00> : vector<1x2xf32>
    %13 = vector.multi_reduction <add>, %12, %cst_8 [1] : vector<1x32x2xf32> to vector<1x2xf32>
    %14 = vector.shape_cast %13 : vector<1x2xf32> to vector<1x1x2xf32>
    %cst_9 = arith.constant 0.000000e+00 : f32
    %15 = vector.broadcast %cst_9 : f32 to vector<1x1x2xf32>
    %16 = arith.maximumf %14, %15 : vector<1x1x2xf32>
    %17 = vector.broadcast %6 : vector<1x32x1xf32> to vector<1x32x2xf32>
    %18 = arith.mulf %8, %17 : vector<1x32x2xf32>
    %cst_10 = arith.constant dense<0.000000e+00> : vector<1x2xf32>
    %19 = vector.multi_reduction <add>, %18, %cst_10 [1] : vector<1x32x2xf32> to vector<1x2xf32>
    %20 = vector.shape_cast %19 : vector<1x2xf32> to vector<1x1x2xf32>
    %cst_11 = arith.constant 0.000000e+00 : f32
    %21 = vector.broadcast %cst_11 : f32 to vector<1x1x2xf32>
    %22 = arith.maximumf %20, %21 : vector<1x1x2xf32>
    %23 = vector.broadcast %16 : vector<1x1x2xf32> to vector<1x32x2xf32>
    %24 = arith.mulf %10, %23 : vector<1x32x2xf32>
    %cst_12 = arith.constant dense<0.000000e+00> : vector<1x32xf32>
    %25 = vector.multi_reduction <add>, %24, %cst_12 [2] : vector<1x32x2xf32> to vector<1x32xf32>
    %26 = vector.shape_cast %25 : vector<1x32xf32> to vector<1x32x1xf32>
    %27 = vector.broadcast %22 : vector<1x1x2xf32> to vector<1x32x2xf32>
    %28 = arith.mulf %10, %27 : vector<1x32x2xf32>
    %cst_13 = arith.constant dense<0.000000e+00> : vector<1x32xf32>
    %29 = vector.multi_reduction <add>, %28, %cst_13 [2] : vector<1x32x2xf32> to vector<1x32xf32>
    %30 = vector.shape_cast %29 : vector<1x32xf32> to vector<1x32x1xf32>
    %31 = arith.addf %26, %30 : vector<1x32x1xf32>
    %32 = arith.negf %31 : vector<1x32x1xf32>
    %33 = math.exp %32 : vector<1x32x1xf32>
    %cst_14 = arith.constant 1.000000e+00 : f32
    %34 = vector.broadcast %cst_14 : f32 to vector<1x32x1xf32>
    %35 = arith.addf %34, %33 : vector<1x32x1xf32>
    %36 = arith.divf %34, %35 : vector<1x32x1xf32>
    %37 = vector.broadcast %36 : vector<1x32x1xf32> to vector<1x32x256xf32>
    %38 = arith.mulf %0, %37 : vector<1x32x256xf32>
    %c0_15 = arith.constant 0 : index
    %c0_16 = arith.constant 0 : index
    %c0_17 = arith.constant 0 : index
    %39 = vector.load %arg5[%c0_15, %c0_16, %c0_17] : memref<1x32x256xf32, #tpu.memory_space<vmem>>, vector<1x32x256xf32>
    tpu.vector_store %arg5[%c0_15, %c0_16, %c0_17], %38 {strides = array<i32>} : memref<1x32x256xf32, #tpu.memory_space<vmem>>, vector<1x32x256xf32>,
    %cst_18 = arith.constant dense<0.000000e+00> : vector<1x256xf32>
    %40 = vector.multi_reduction <add>, %38, %cst_18 [1] : vector<1x32x256xf32> to vector<1x256xf32>
    %41 = vector.shape_cast %40 : vector<1x256xf32> to vector<1x1x256xf32>
    %cst_19 = arith.constant 3.200000e+01 : f32
    %42 = vector.broadcast %cst_19 : f32 to vector<1x1x256xf32>
    %43 = arith.divf %41, %42 : vector<1x1x256xf32>
    %cst_20 = arith.constant dense<0xFF800000> : vector<1x256xf32>
    %44 = vector.multi_reduction <maximumf>, %38, %cst_20 [1] : vector<1x32x256xf32> to vector<1x256xf32>
    %45 = vector.shape_cast %44 : vector<1x256xf32> to vector<1x1x256xf32>
    %46 = tpu.concatenate %43, %45 in 1 : vector<1x1x256xf32>, vector<1x1x256xf32> -> vector<1x2x256xf32>
    %47 = vector.extract_strided_slice %46 {offsets = [0, 0, 208], sizes = [1, 2, 48], strides = [1, 1, 1]} : vector<1x2x256xf32> to vector<1x2x48xf32>
    %48 = vector.extract_strided_slice %46 {offsets = [0, 0, 0], sizes = [1, 2, 208], strides = [1, 1, 1]} : vector<1x2x256xf32> to vector<1x2x208xf32>
    %49 = tpu.concatenate %47, %48 in 2 : vector<1x2x48xf32>, vector<1x2x208xf32> -> vector<1x2x256xf32>
    %50 = vector.extract_strided_slice %46 {offsets = [0, 0, 224], sizes = [1, 2, 32], strides = [1, 1, 1]} : vector<1x2x256xf32> to vector<1x2x32xf32>
    %51 = vector.extract_strided_slice %46 {offsets = [0, 0, 0], sizes = [1, 2, 224], strides = [1, 1, 1]} : vector<1x2x256xf32> to vector<1x2x224xf32>
    %52 = tpu.concatenate %50, %51 in 2 : vector<1x2x32xf32>, vector<1x2x224xf32> -> vector<1x2x256xf32>
    %53 = vector.extract_strided_slice %46 {offsets = [0, 0, 240], sizes = [1, 2, 16], strides = [1, 1, 1]} : vector<1x2x256xf32> to vector<1x2x16xf32>
    %54 = vector.extract_strided_slice %46 {offsets = [0, 0, 0], sizes = [1, 2, 240], strides = [1, 1, 1]} : vector<1x2x256xf32> to vector<1x2x240xf32>
    %55 = tpu.concatenate %53, %54 in 2 : vector<1x2x16xf32>, vector<1x2x240xf32> -> vector<1x2x256xf32>
    %56 = vector.extract_strided_slice %46 {offsets = [0, 0, 16], sizes = [1, 2, 240], strides = [1, 1, 1]} : vector<1x2x256xf32> to vector<1x2x240xf32>
    %57 = vector.extract_strided_slice %46 {offsets = [0, 0, 0], sizes = [1, 2, 16], strides = [1, 1, 1]} : vector<1x2x256xf32> to vector<1x2x16xf32>
    %58 = tpu.concatenate %56, %57 in 2 : vector<1x2x240xf32>, vector<1x2x16xf32> -> vector<1x2x256xf32>
    %59 = vector.extract_strided_slice %46 {offsets = [0, 0, 32], sizes = [1, 2, 224], strides = [1, 1, 1]} : vector<1x2x256xf32> to vector<1x2x224xf32>
    %60 = vector.extract_strided_slice %46 {offsets = [0, 0, 0], sizes = [1, 2, 32], strides = [1, 1, 1]} : vector<1x2x256xf32> to vector<1x2x32xf32>
    %61 = tpu.concatenate %59, %60 in 2 : vector<1x2x224xf32>, vector<1x2x32xf32> -> vector<1x2x256xf32>
    %62 = vector.extract_strided_slice %46 {offsets = [0, 0, 48], sizes = [1, 2, 208], strides = [1, 1, 1]} : vector<1x2x256xf32> to vector<1x2x208xf32>
    %63 = vector.extract_strided_slice %46 {offsets = [0, 0, 0], sizes = [1, 2, 48], strides = [1, 1, 1]} : vector<1x2x256xf32> to vector<1x2x48xf32>
    %64 = tpu.concatenate %62, %63 in 2 : vector<1x2x208xf32>, vector<1x2x48xf32> -> vector<1x2x256xf32>
    %65 = tpu.concatenate %49, %52, %55, %46, %58, %61, %64 in 1 : vector<1x2x256xf32>, vector<1x2x256xf32>, vector<1x2x256xf32>, vector<1x2x256xf32>, vector<1x2x256xf32>, vector<1x2x256xf32>, vector<1x2x256xf32> -> vector<1x14x256xf32>
    %cst_21 = arith.constant 0.000000e+00 : f32
    %66 = vector.broadcast %cst_21 : f32 to vector<1x14x256xf32>
    %67 = vector.extract_strided_slice %65 {offsets = [0, 0, 253], sizes = [1, 14, 3], strides = [1, 1, 1]} : vector<1x14x256xf32> to vector<1x14x3xf32>
    %68 = vector.extract_strided_slice %65 {offsets = [0, 0, 0], sizes = [1, 14, 253], strides = [1, 1, 1]} : vector<1x14x256xf32> to vector<1x14x253xf32>
    %69 = tpu.concatenate %67, %68 in 2 : vector<1x14x3xf32>, vector<1x14x253xf32> -> vector<1x14x256xf32>
    %c0_22 = arith.constant 0 : index
    %c0_23 = arith.constant 0 : index
    %c0_24 = arith.constant 0 : index
    %70 = vector.load %arg4[%c0_22, %c0_23, %c0_24] : memref<7x14x256xf32, #tpu.memory_space<vmem>>, vector<1x14x256xf32>
    %71 = vector.shape_cast %70 : vector<1x14x256xf32> to vector<14x256xf32>
    %72 = vector.shape_cast %71 : vector<14x256xf32> to vector<1x14x256xf32>
    %73 = arith.mulf %72, %69 : vector<1x14x256xf32>
    %74 = arith.addf %66, %73 : vector<1x14x256xf32>
    %75 = vector.extract_strided_slice %65 {offsets = [0, 0, 254], sizes = [1, 14, 2], strides = [1, 1, 1]} : vector<1x14x256xf32> to vector<1x14x2xf32>
    %76 = vector.extract_strided_slice %65 {offsets = [0, 0, 0], sizes = [1, 14, 254], strides = [1, 1, 1]} : vector<1x14x256xf32> to vector<1x14x254xf32>
    %77 = tpu.concatenate %75, %76 in 2 : vector<1x14x2xf32>, vector<1x14x254xf32> -> vector<1x14x256xf32>
    %c1 = arith.constant 1 : index
    %c0_25 = arith.constant 0 : index
    %c0_26 = arith.constant 0 : index
    %78 = vector.load %arg4[%c1, %c0_25, %c0_26] : memref<7x14x256xf32, #tpu.memory_space<vmem>>, vector<1x14x256xf32>
    %79 = vector.shape_cast %78 : vector<1x14x256xf32> to vector<14x256xf32>
    %80 = vector.shape_cast %79 : vector<14x256xf32> to vector<1x14x256xf32>
    %81 = arith.mulf %80, %77 : vector<1x14x256xf32>
    %82 = arith.addf %74, %81 : vector<1x14x256xf32>
    %83 = vector.extract_strided_slice %65 {offsets = [0, 0, 255], sizes = [1, 14, 1], strides = [1, 1, 1]} : vector<1x14x256xf32> to vector<1x14x1xf32>
    %84 = vector.extract_strided_slice %65 {offsets = [0, 0, 0], sizes = [1, 14, 255], strides = [1, 1, 1]} : vector<1x14x256xf32> to vector<1x14x255xf32>
    %85 = tpu.concatenate %83, %84 in 2 : vector<1x14x1xf32>, vector<1x14x255xf32> -> vector<1x14x256xf32>
    %c2 = arith.constant 2 : index
    %c0_27 = arith.constant 0 : index
    %c0_28 = arith.constant 0 : index
    %86 = vector.load %arg4[%c2, %c0_27, %c0_28] : memref<7x14x256xf32, #tpu.memory_space<vmem>>, vector<1x14x256xf32>
    %87 = vector.shape_cast %86 : vector<1x14x256xf32> to vector<14x256xf32>
    %88 = vector.shape_cast %87 : vector<14x256xf32> to vector<1x14x256xf32>
    %89 = arith.mulf %88, %85 : vector<1x14x256xf32>
    %90 = arith.addf %82, %89 : vector<1x14x256xf32>
    %c3 = arith.constant 3 : index
    %c0_29 = arith.constant 0 : index
    %c0_30 = arith.constant 0 : index
    %91 = vector.load %arg4[%c3, %c0_29, %c0_30] : memref<7x14x256xf32, #tpu.memory_space<vmem>>, vector<1x14x256xf32>
    %92 = vector.shape_cast %91 : vector<1x14x256xf32> to vector<14x256xf32>
    %93 = vector.shape_cast %92 : vector<14x256xf32> to vector<1x14x256xf32>
    %94 = arith.mulf %93, %65 : vector<1x14x256xf32>
    %95 = arith.addf %90, %94 : vector<1x14x256xf32>
    %96 = vector.extract_strided_slice %65 {offsets = [0, 0, 1], sizes = [1, 14, 255], strides = [1, 1, 1]} : vector<1x14x256xf32> to vector<1x14x255xf32>
    %97 = vector.extract_strided_slice %65 {offsets = [0, 0, 0], sizes = [1, 14, 1], strides = [1, 1, 1]} : vector<1x14x256xf32> to vector<1x14x1xf32>
    %98 = tpu.concatenate %96, %97 in 2 : vector<1x14x255xf32>, vector<1x14x1xf32> -> vector<1x14x256xf32>
    %c4 = arith.constant 4 : index
    %c0_31 = arith.constant 0 : index
    %c0_32 = arith.constant 0 : index
    %99 = vector.load %arg4[%c4, %c0_31, %c0_32] : memref<7x14x256xf32, #tpu.memory_space<vmem>>, vector<1x14x256xf32>
    %100 = vector.shape_cast %99 : vector<1x14x256xf32> to vector<14x256xf32>
    %101 = vector.shape_cast %100 : vector<14x256xf32> to vector<1x14x256xf32>
    %102 = arith.mulf %101, %98 : vector<1x14x256xf32>
    %103 = arith.addf %95, %102 : vector<1x14x256xf32>
    %104 = vector.extract_strided_slice %65 {offsets = [0, 0, 2], sizes = [1, 14, 254], strides = [1, 1, 1]} : vector<1x14x256xf32> to vector<1x14x254xf32>
    %105 = vector.extract_strided_slice %65 {offsets = [0, 0, 0], sizes = [1, 14, 2], strides = [1, 1, 1]} : vector<1x14x256xf32> to vector<1x14x2xf32>
    %106 = tpu.concatenate %104, %105 in 2 : vector<1x14x254xf32>, vector<1x14x2xf32> -> vector<1x14x256xf32>
    %c5 = arith.constant 5 : index
    %c0_33 = arith.constant 0 : index
    %c0_34 = arith.constant 0 : index
    %107 = vector.load %arg4[%c5, %c0_33, %c0_34] : memref<7x14x256xf32, #tpu.memory_space<vmem>>, vector<1x14x256xf32>
    %108 = vector.shape_cast %107 : vector<1x14x256xf32> to vector<14x256xf32>
    %109 = vector.shape_cast %108 : vector<14x256xf32> to vector<1x14x256xf32>
    %110 = arith.mulf %109, %106 : vector<1x14x256xf32>
    %111 = arith.addf %103, %110 : vector<1x14x256xf32>
    %112 = vector.extract_strided_slice %65 {offsets = [0, 0, 3], sizes = [1, 14, 253], strides = [1, 1, 1]} : vector<1x14x256xf32> to vector<1x14x253xf32>
    %113 = vector.extract_strided_slice %65 {offsets = [0, 0, 0], sizes = [1, 14, 3], strides = [1, 1, 1]} : vector<1x14x256xf32> to vector<1x14x3xf32>
    %114 = tpu.concatenate %112, %113 in 2 : vector<1x14x253xf32>, vector<1x14x3xf32> -> vector<1x14x256xf32>
    %c6 = arith.constant 6 : index
    %c0_35 = arith.constant 0 : index
    %c0_36 = arith.constant 0 : index
    %115 = vector.load %arg4[%c6, %c0_35, %c0_36] : memref<7x14x256xf32, #tpu.memory_space<vmem>>, vector<1x14x256xf32>
    %116 = vector.shape_cast %115 : vector<1x14x256xf32> to vector<14x256xf32>
    %117 = vector.shape_cast %116 : vector<14x256xf32> to vector<1x14x256xf32>
    %118 = arith.mulf %117, %114 : vector<1x14x256xf32>
    %119 = arith.addf %111, %118 : vector<1x14x256xf32>
    %cst_37 = arith.constant dense<0.000000e+00> : vector<1x256xf32>
    %120 = vector.multi_reduction <add>, %119, %cst_37 [1] : vector<1x14x256xf32> to vector<1x256xf32>
    %121 = vector.shape_cast %120 : vector<1x256xf32> to vector<1x1x256xf32>
    %122 = arith.negf %121 : vector<1x1x256xf32>
    %123 = math.exp %122 : vector<1x1x256xf32>
    %cst_38 = arith.constant 1.000000e+00 : f32
    %124 = vector.broadcast %cst_38 : f32 to vector<1x1x256xf32>
    %125 = arith.addf %124, %123 : vector<1x1x256xf32>
    %126 = arith.divf %124, %125 : vector<1x1x256xf32>
    %c0_39 = arith.constant 0 : index
    %c0_40 = arith.constant 0 : index
    %c0_41 = arith.constant 0 : index
    %127 = vector.load %arg5[%c0_39, %c0_40, %c0_41] : memref<1x32x256xf32, #tpu.memory_space<vmem>>, vector<1x32x256xf32>
    %128 = vector.broadcast %126 : vector<1x1x256xf32> to vector<1x32x256xf32>
    %129 = arith.mulf %127, %128 : vector<1x32x256xf32>
    %c0_42 = arith.constant 0 : index
    %c0_43 = arith.constant 0 : index
    %c0_44 = arith.constant 0 : index
    %130 = vector.load %arg5[%c0_42, %c0_43, %c0_44] : memref<1x32x256xf32, #tpu.memory_space<vmem>>, vector<1x32x256xf32>
    tpu.vector_store %arg5[%c0_42, %c0_43, %c0_44], %129 {strides = array<i32>} : memref<1x32x256xf32, #tpu.memory_space<vmem>>, vector<1x32x256xf32>,
    return
  }
  func.func @transform_0(%arg0: i32) -> (i32, i32, i32) {
    %c0_i32 = arith.constant 0 : i32
    %c0_i32_0 = arith.constant 0 : i32
    %c0_i32_1 = arith.constant 0 : i32
    return %arg0, %c0_i32, %c0_i32_0 : i32, i32, i32
  }
  func.func @transform_1(%arg0: i32) -> (i32, i32) {
    %c0_i32 = arith.constant 0 : i32
    %c0_i32_0 = arith.constant 0 : i32
    %c0_i32_1 = arith.constant 0 : i32
    return %c0_i32, %c0_i32_0 : i32, i32
  }
  func.func @transform_2(%arg0: i32) -> (i32, i32) {
    %c0_i32 = arith.constant 0 : i32
    %c0_i32_0 = arith.constant 0 : i32
    %c0_i32_1 = arith.constant 0 : i32
    return %c0_i32, %c0_i32_0 : i32, i32
  }
  func.func @transform_3(%arg0: i32) -> (i32, i32, i32) {
    %c0_i32 = arith.constant 0 : i32
    %c0_i32_0 = arith.constant 0 : i32
    %c0_i32_1 = arith.constant 0 : i32
    %c0_i32_2 = arith.constant 0 : i32
    return %c0_i32, %c0_i32_0, %c0_i32_1 : i32, i32, i32
  }
  func.func @transform_4(%arg0: i32) -> (i32, i32, i32) {
    %c0_i32 = arith.constant 0 : i32
    %c0_i32_0 = arith.constant 0 : i32
    %c0_i32_1 = arith.constant 0 : i32
    return %arg0, %c0_i32, %c0_i32_0 : i32, i32, i32
  }
}

</mosaic_0001>

<llo_original>
// kernel: cbam_forward.1
$region0: #{cbam_forward.1}
  #allocation0 [shape = 'u32[]', space=smem, size = 0x4, offset = 0x4, fixed_abs, tag = 'smem constant byte address 0x4 - core index']
  #allocation1 [shape = 'u32[72,128]{1,0:T(1,128)}', space=vmem, size = 0x9000, scoped, tag = 'internal scratch']
  %s0 = inlined_call_operand.vmem [shape: f32[2,32,256], index: 0, kind: input, shape index: {}]
  %s1 = inlined_call_operand.vmem [shape: f32[32,2], index: 1, kind: input, shape index: {}]
  %s2 = inlined_call_operand.vmem [shape: f32[32,2], index: 2, kind: input, shape index: {}]
  %s3 = inlined_call_operand.vmem [shape: f32[7,14,256], index: 3, kind: input, shape index: {}]
  %s4 = inlined_call_operand.vmem [shape: f32[2,32,256], index: 4, kind: output, shape index: {}]
  %s5 = sld [smem:[#allocation0]]
  $region49: #{cbam_forward.1} parent=0
    _
  %s7 = ssub.s32 1, %s5
  %s8 = scalar_select 0, %s7, %s5
  loop: start=0, step=1, limit=4
  $region2: #{cbam_forward.1} parent=0 // loop_pre_header
    _
  $region3: #{cbam_forward.1} parent=0 // loop_header
    %s10 = sphi 0, %s14
    %p11 = scmp.ge.s32.totalorder %s10, 4
    %s20 = sphi 0, %s22
    %s23 = sphi 0, %s20
    %s24 = sphi 0, %s23
    %s40 = sphi 0, %s24
    %s44 = sphi 0, %s44
    %s46 = sphi 0, %s44
    %s47 = sphi 0, %s46
    %s61 = sphi 0, %s47
    %s65 = sphi 0, %s65
    %s67 = sphi 0, %s65
    %s68 = sphi 0, %s67
    %s82 = sphi 0, %s68
    %s86 = sphi 0, %s86
    %s88 = sphi 0, %s86
    %s89 = sphi 0, %s88
    %s103 = sphi 0, %s89
    %s109 = sphi 0, %s111
    %s112 = sphi 0, %s109
    %s113 = sphi 0, %s112
    %s129 = sphi 0, %s113
  $region4: #{cbam_forward.1} parent=0 // loop_header_branch
    %13 = sbr.rel (%p11) target = $region8
  $region5: #{cbam_forward.1} parent=0 // loop_body
    %s15 = ssub.s32 %s10, 1
    %s16 = ssub.s32 %s10, 2
    %s17 = sadd.s32 %s10, 1
    %s18 = ssub.s32 %s10, %s17
    %p19 = scmp.eq.s32.totalorder %s18, 0
    %s21 = sadd.s32 %s20, 1
    %s22 = scalar_select %p19, %s20, %s21
    %p25 = pneg %p19
    %p26 = scmp.eq.s32.totalorder %s10, 1
    %p27 = por %p25, %p26
    %p28 = scmp.ne.s32.totalorder %s20, %s23
    %p29 = scmp.eq.s32.totalorder %s10, 0
    %p30 = por %p28, %p29
    %p31 = scmp.ne.s32.totalorder %s20, %s23
    %p32 = scmp.eq.s32.totalorder %s15, 1
    %p33 = por %p31, %p32
    %p34 = scmp.ne.s32.totalorder %s23, %s24
    %p35 = scmp.eq.s32.totalorder %s15, 0
    %p36 = por %p34, %p35
    %p37 = scmp.ne.s32.totalorder %s23, %s24
    %p38 = scmp.eq.s32.totalorder %s16, 1
    %p39 = por %p37, %p38
    %p41 = scmp.ne.s32.totalorder %s24, %s40
    %p42 = scmp.eq.s32.totalorder %s16, 0
    %p43 = por %p41, %p42
    %s45 = sadd.s32 %s44, 1
    %p48 = scmp.eq.s32.totalorder %s10, 1
    %p49 = scmp.ne.s32.totalorder %s44, %s46
    %p50 = scmp.eq.s32.totalorder %s10, 0
    %p51 = por %p49, %p50
    %p52 = scmp.ne.s32.totalorder %s44, %s46
    %p53 = scmp.eq.s32.totalorder %s15, 1
    %p54 = por %p52, %p53
    %p55 = scmp.ne.s32.totalorder %s46, %s47
    %p56 = scmp.eq.s32.totalorder %s15, 0
    %p57 = por %p55, %p56
    %p58 = scmp.ne.s32.totalorder %s46, %s47
    %p59 = scmp.eq.s32.totalorder %s16, 1
    %p60 = por %p58, %p59
    %p62 = scmp.ne.s32.totalorder %s47, %s61
    %p63 = scmp.eq.s32.totalorder %s16, 0
    %p64 = por %p62, %p63
    %s66 = sadd.s32 %s65, 1
    %p69 = scmp.eq.s32.totalorder %s10, 1
    %p70 = scmp.ne.s32.totalorder %s65, %s67
    %p71 = scmp.eq.s32.totalorder %s10, 0
    %p72 = por %p70, %p71
    %p73 = scmp.ne.s32.totalorder %s65, %s67
    %p74 = scmp.eq.s32.totalorder %s15, 1
    %p75 = por %p73, %p74
    %p76 = scmp.ne.s32.totalorder %s67, %s68
    %p77 = scmp.eq.s32.totalorder %s15, 0
    %p78 = por %p76, %p77
    %p79 = scmp.ne.s32.totalorder %s67, %s68
    %p80 = scmp.eq.s32.totalorder %s16, 1
    %p81 = por %p79, %p80
    %p83 = scmp.ne.s32.totalorder %s68, %s82
    %p84 = scmp.eq.s32.totalorder %s16, 0
    %p85 = por %p83, %p84
    %s87 = sadd.s32 %s86, 1
    %p90 = scmp.eq.s32.totalorder %s10, 1
    %p91 = scmp.ne.s32.totalorder %s86, %s88
    %p92 = scmp.eq.s32.totalorder %s10, 0
    %p93 = por %p91, %p92
    %p94 = scmp.ne.s32.totalorder %s86, %s88
    %p95 = scmp.eq.s32.totalorder %s15, 1
    %p96 = por %p94, %p95
    %p97 = scmp.ne.s32.totalorder %s88, %s89
    %p98 = scmp.eq.s32.totalorder %s15, 0
    %p99 = por %p97, %p98
    %p100 = scmp.ne.s32.totalorder %s88, %s89
    %p101 = scmp.eq.s32.totalorder %s16, 1
    %p102 = por %p100, %p101
    %p104 = scmp.ne.s32.totalorder %s89, %s103
    %p105 = scmp.eq.s32.totalorder %s16, 0
    %p106 = por %p104, %p105
    %s107 = ssub.s32 %s10, %s17
    %p108 = scmp.eq.s32.totalorder %s107, 0
    %s110 = sadd.s32 %s109, 1
    %s111 = scalar_select %p108, %s109, %s110
    %p114 = pneg %p108
    %p115 = scmp.eq.s32.totalorder %s10, 1
    %p116 = por %p114, %p115
    %p117 = scmp.ne.s32.totalorder %s109, %s112
    %p118 = scmp.eq.s32.totalorder %s10, 0
    %p119 = por %p117, %p118
    %p120 = scmp.ne.s32.totalorder %s109, %s112
    %p121 = scmp.eq.s32.totalorder %s15, 1
    %p122 = por %p120, %p121
    %p123 = scmp.ne.s32.totalorder %s112, %s113
    %p124 = scmp.eq.s32.totalorder %s15, 0
    %p125 = por %p123, %p124
    %p126 = scmp.ne.s32.totalorder %s112, %s113
    %p127 = scmp.eq.s32.totalorder %s16, 1
    %p128 = por %p126, %p127
    %p130 = scmp.ne.s32.totalorder %s113, %s129
    %p131 = scmp.eq.s32.totalorder %s16, 0
    %p132 = por %p130, %p131
    %p133 = scmp.le.s32.totalorder 1, %s10
    %p134 = scmp.lt.s32.totalorder %s10, 3
    %p135 = pnand %p133, %p134
    %p136 = pneg %p135
    // Predicated region
    $region9: #{cbam_forward.1} parent=5 // pred_check
      _
    $region10: #{cbam_forward.1} parent=5 // pred_check_branch
      %138 = sbr.rel (%p135) target = $region12
    $region11: #{cbam_forward.1} parent=5 // pred_region
      %s139 = ssub.s32 %s10, 1
      // Predicated region
      $region13: #{cbam_forward.1} parent=11 // pred_check
        %p140 = pneg %p57
      $region14: #{cbam_forward.1} parent=11 // pred_check_branch
        %142 = sbr.rel (%p140) target = $region16
      $region15: #{cbam_forward.1} parent=11 // pred_region
        _
      $region16: #{cbam_forward.1} parent=11 // pred_fallthru
        _
      // Predicated region
      $region17: #{cbam_forward.1} parent=11 // pred_check
        %p143 = pneg %p78
      $region18: #{cbam_forward.1} parent=11 // pred_check_branch
        %145 = sbr.rel (%p143) target = $region20
      $region19: #{cbam_forward.1} parent=11 // pred_region
        _
      $region20: #{cbam_forward.1} parent=11 // pred_fallthru
        _
      // Predicated region
      $region21: #{cbam_forward.1} parent=11 // pred_check
        %p146 = pneg %p99
      $region22: #{cbam_forward.1} parent=11 // pred_check_branch
        %148 = sbr.rel (%p146) target = $region24
      $region23: #{cbam_forward.1} parent=11 // pred_region
        _
      $region24: #{cbam_forward.1} parent=11 // pred_fallthru
        _
    $region12: #{cbam_forward.1} parent=5 // pred_fallthru
      _
    %p149 = scmp.lt.s32.totalorder %s10, 2
    // Predicated region
    $region25: #{cbam_forward.1} parent=5 // pred_check
      %p150 = pneg %p149
    $region26: #{cbam_forward.1} parent=5 // pred_check_branch
      %152 = sbr.rel (%p150) target = $region28
    $region27: #{cbam_forward.1} parent=5 // pred_region
      // Predicated region
      $region29: #{cbam_forward.1} parent=27 // pred_check
        %p153 = pneg %p30
      $region30: #{cbam_forward.1} parent=27 // pred_check_branch
        %155 = sbr.rel (%p153) target = $region32
      $region31: #{cbam_forward.1} parent=27 // pred_region
        %p156 = scmp.lt.s32.totalorder %s10, 1
        %s157 = scalar_select %p156, %s10, 1
        %s158 = smul.addr %s157, 8
        %s159 = smul.addr %s158, 8
        %s160 = scalar_lea.vmem %s0, %s159
      $region32: #{cbam_forward.1} parent=27 // pred_fallthru
        _
    $region28: #{cbam_forward.1} parent=5 // pred_fallthru
      _
    %p161 = scmp.le.s32.totalorder 1, %s10
    %p162 = scmp.lt.s32.totalorder %s10, 3
    %p163 = pnand %p161, %p162
    %p164 = pneg %p163
    // Predicated region
    $region33: #{cbam_forward.1} parent=5 // pred_check
      _
    $region34: #{cbam_forward.1} parent=5 // pred_check_branch
      %166 = sbr.rel (%p163) target = $region36
    $region35: #{cbam_forward.1} parent=5 // pred_region
      %s167 = ssub.s32 %s10, 1
      %p168 = scmp.lt.s32.totalorder %s15, 1
      %s169 = scalar_select %p168, %s15, 1
      %s170 = smul.addr %s169, 8
      %s171 = smul.addr %s170, 8
      %s172 = scalar_lea.vmem %s0, %s171
      %p173 = pneg %p36
      %p174 = pneg %p33
      %p175 = pneg %p57
      %p176 = pneg %p54
      %p177 = pneg %p78
      %p178 = pneg %p75
      %p179 = pneg %p99
      %p180 = pneg %p96
      %p181 = pneg %p125
      %p182 = pneg %p122
      %p183 = scmp.lt.s32.totalorder %s15, 1
      %s184 = scalar_select %p183, %s15, 1
      %s185 = smul.addr %s184, 8
      %s186 = smul.addr %s185, 8
      %s187 = scalar_lea.vmem %s4, %s186
      %p188 = scmp.lt.s32.totalorder %s15, 1
      %s189 = scalar_select %p188, %s15, 1
      %s190 = smul.addr %s189, 8
      %s191 = smul.addr %s190, 8
      %s192 = scalar_lea.vmem %s0, %s191
      %p193 = scmp.lt.s32.totalorder %s15, 1
      %s194 = scalar_select %p193, %s15, 1
      %s195 = smul.addr %s194, 8
      %s196 = smul.addr %s195, 8
      %s197 = scalar_lea.vmem %s4, %s196
      %v198 = vld [vmem:[%s192] sm:$0xff]
      %v199 = vld [vmem:[%s192 + $0x8] sm:$0xff]
      %v200 = vld [vmem:[%s192 + $0x10] sm:$0xff]
      %v201 = vld [vmem:[%s192 + $0x18] sm:$0xff]
      %v202 = vld [vmem:[%s192 + $0x20] sm:$0xff]
      %v203 = vld [vmem:[%s192 + $0x28] sm:$0xff]
      %v204 = vld [vmem:[%s192 + $0x30] sm:$0xff]
      %v205 = vld [vmem:[%s192 + $0x38] sm:$0xff]
      %v206 = vadd.f32 %v198, %v199
      %207 = vadd.xlane.f32.xlu0 %v206
      %v208 = vpop.xlane.xlu0 %207
      %v209 = vadd.f32 %v200, %v201
      %210 = vadd.xlane.f32.xlu0 %v209
      %v211 = vpop.xlane.xlu0 %210
      %v212 = vadd.f32 %v202, %v203
      %213 = vadd.xlane.f32.xlu0 %v212
      %v214 = vpop.xlane.xlu0 %213
      %v215 = vadd.f32 %v204, %v205
      %216 = vadd.xlane.f32.xlu0 %v215
      %v217 = vpop.xlane.xlu0 %216
      %v218 = vrcp.pop 256.0
      %v219 = vmul.f32 256.0, %v218
      %v220 = vsub.f32 1.0, %v219
      %v221 = vmul.f32 %v218, %v220
      %v222 = vadd.f32 %v218, %v221
      %vm223 = vweird.f32 %v218
      %v224 = vsel %vm223, %v218, %v222
      %v225 = vmul.f32 %v208, %v224
      %v226 = vmul.f32 %v211, %v224
      %v227 = vmul.f32 %v214, %v224
      %v228 = vmul.f32 %v217, %v224
      %v229 = vmax.f32 %v198, %v199
      %230 = vmax.xlane.f32.xlu0 %v229
      %v231 = vpop.xlane.xlu0 %230
      %v232 = vmax.f32 %v200, %v201
      %233 = vmax.xlane.f32.xlu0 %v232
      %v234 = vpop.xlane.xlu0 %233
      %v235 = vmax.f32 %v202, %v203
      %236 = vmax.xlane.f32.xlu0 %v235
      %v237 = vpop.xlane.xlu0 %236
      %v238 = vmax.f32 %v204, %v205
      %239 = vmax.xlane.f32.xlu0 %v238
      %v240 = vpop.xlane.xlu0 %239
      %v241 = vld [vmem:[%s1] sm:$0xff]
      %v242 = vld [vmem:[%s1 + $0x8] sm:$0xff]
      %v243 = vld [vmem:[%s1 + $0x10] sm:$0xff]
      %v244 = vld [vmem:[%s1 + $0x18] sm:$0xff]
      %v245 = vld [vmem:[%s2] sm:$0xff]
      %v246 = vld [vmem:[%s2 + $0x8] sm:$0xff]
      %v247 = vld [vmem:[%s2 + $0x10] sm:$0xff]
      %v248 = vld [vmem:[%s2 + $0x18] sm:$0xff]
      %v249 = vmul.f32 %v241, %v225
      %v250 = vmul.f32 %v242, %v226
      %v251 = vmul.f32 %v243, %v227
      %v252 = vmul.f32 %v244, %v228
      %vm253 = vcmask 15360
      %v254 = vsel %vm253, %v249, 0.0
      %v255 = vsel %vm253, %v250, 0.0
      %v256 = vadd.f32 %v254, %v255
      %v257 = vsel %vm253, %v251, 0.0
      %v258 = vadd.f32 %v256, %v257
      %v259 = vsel %vm253, %v252, 0.0
      %v260 = vadd.f32 %v258, %v259
      %v261 = vrot.slane %v260, 4
      %v262 = vadd.f32 %v260, %v261
      %v263 = vrot.slane %v262, 2
      %v264 = vadd.f32 %v262, %v263
      %v265 = vrot.slane %v264, 1
      %v266 = vadd.f32 %v264, %v265
      %v267 = vmax.f32 %v266, 0.0
      %v268 = vmul.f32 %v241, %v231
      %v269 = vmul.f32 %v242, %v234
      %v270 = vmul.f32 %v243, %v237
      %v271 = vmul.f32 %v244, %v240
      %v272 = vsel %vm253, %v268, 0.0
      %v273 = vsel %vm253, %v269, 0.0
      %v274 = vadd.f32 %v272, %v273
      %v275 = vsel %vm253, %v270, 0.0
      %v276 = vadd.f32 %v274, %v275
      %v277 = vsel %vm253, %v271, 0.0
      %v278 = vadd.f32 %v276, %v277
      %v279 = vrot.slane %v278, 4
      %v280 = vadd.f32 %v278, %v279
      %v281 = vrot.slane %v280, 2
      %v282 = vadd.f32 %v280, %v281
      %v283 = vrot.slane %v282, 1
      %v284 = vadd.f32 %v282, %v283
      %v285 = vmax.f32 %v284, 0.0
      %v286 = vmul.f32 %v245, %v267
      %v287 = vmul.f32 %v246, %v267
      %v288 = vmul.f32 %v247, %v267
      %v289 = vmul.f32 %v248, %v267
      %v290 = vsel %vm253, %v286, 0.0
      %291 = vadd.xlane.f32.xlu0 %v290
      %v292 = vpop.xlane.xlu0 %291
      %v293 = vsel %vm253, %v287, 0.0
      %294 = vadd.xlane.f32.xlu0 %v293
      %v295 = vpop.xlane.xlu0 %294
      %v296 = vsel %vm253, %v288, 0.0
      %297 = vadd.xlane.f32.xlu0 %v296
      %v298 = vpop.xlane.xlu0 %297
      %v299 = vsel %vm253, %v289, 0.0
      %300 = vadd.xlane.f32.xlu0 %v299
      %v301 = vpop.xlane.xlu0 %300
      %v302 = vmul.f32 %v245, %v285
      %v303 = vmul.f32 %v246, %v285
      %v304 = vmul.f32 %v247, %v285
      %v305 = vmul.f32 %v248, %v285
      %v306 = vsel %vm253, %v302, 0.0
      %307 = vadd.xlane.f32.xlu0 %v306
      %v308 = vpop.xlane.xlu0 %307
      %v309 = vsel %vm253, %v303, 0.0
      %310 = vadd.xlane.f32.xlu0 %v309
      %v311 = vpop.xlane.xlu0 %310
      %v312 = vsel %vm253, %v304, 0.0
      %313 = vadd.xlane.f32.xlu0 %v312
      %v314 = vpop.xlane.xlu0 %313
      %v315 = vsel %vm253, %v305, 0.0
      %316 = vadd.xlane.f32.xlu0 %v315
      %v317 = vpop.xlane.xlu0 %316
      %v318 = vadd.f32 %v292, %v308
      %v319 = vadd.f32 %v295, %v311
      %v320 = vadd.f32 %v298, %v314
      %v321 = vadd.f32 %v301, %v317
      %v322 = vxor.u32 %v318, 2147483648
      %v323 = vxor.u32 %v319, 2147483648
      %v324 = vxor.u32 %v320, 2147483648
      %v325 = vxor.u32 %v321, 2147483648
      %v326 = vmul.f32 %v322, 1.442695
      %v327 = vpow.pop %v326
      %v328 = vmul.f32 %v323, 1.442695
      %v329 = vpow.pop %v328
      %v330 = vmul.f32 %v324, 1.442695
      %v331 = vpow.pop %v330
      %v332 = vmul.f32 %v325, 1.442695
      %v333 = vpow.pop %v332
      %v334 = vadd.f32 %v327, 1.0
      %v335 = vadd.f32 %v329, 1.0
      %v336 = vadd.f32 %v331, 1.0
      %v337 = vadd.f32 %v333, 1.0
      %v338 = vrcp.pop %v334
      %v339 = vmul.f32 %v334, %v338
      %v340 = vsub.f32 1.0, %v339
      %v341 = vmul.f32 %v338, %v340
      %v342 = vadd.f32 %v338, %v341
      %vm343 = vweird.f32 %v334
      %vm344 = vweird.f32 %v338
      %vm345 = vmor %vm343, %vm344
      %v346 = vsel %vm345, %v338, %v342
      %v347 = vand.u32 2147483647, %v334
      %vm348 = vcmp.eq.f32.partialorder %v347, 8.507059e+37
      %v349 = vand.u32 %v334, 2147483648
      %v350 = vor.u32 1.1754944e-38, %v349
      %v351 = vsel %vm348, %v350, %v346
      %v352 = vmul.f32 1.0, %v351
      %v353 = vrcp.pop %v335
      %v354 = vmul.f32 %v335, %v353
      %v355 = vsub.f32 1.0, %v354
      %v356 = vmul.f32 %v353, %v355
      %v357 = vadd.f32 %v353, %v356
      %vm358 = vweird.f32 %v335
      %vm359 = vweird.f32 %v353
      %vm360 = vmor %vm358, %vm359
      %v361 = vsel %vm360, %v353, %v357
      %v362 = vand.u32 2147483647, %v335
      %vm363 = vcmp.eq.f32.partialorder %v362, 8.507059e+37
      %v364 = vand.u32 %v335, 2147483648
      %v365 = vor.u32 1.1754944e-38, %v364
      %v366 = vsel %vm363, %v365, %v361
      %v367 = vmul.f32 1.0, %v366
      %v368 = vrcp.pop %v336
      %v369 = vmul.f32 %v336, %v368
      %v370 = vsub.f32 1.0, %v369
      %v371 = vmul.f32 %v368, %v370
      %v372 = vadd.f32 %v368, %v371
      %vm373 = vweird.f32 %v336
      %vm374 = vweird.f32 %v368
      %vm375 = vmor %vm373, %vm374
      %v376 = vsel %vm375, %v368, %v372
      %v377 = vand.u32 2147483647, %v336
      %vm378 = vcmp.eq.f32.partialorder %v377, 8.507059e+37
      %v379 = vand.u32 %v336, 2147483648
      %v380 = vor.u32 1.1754944e-38, %v379
      %v381 = vsel %vm378, %v380, %v376
      %v382 = vmul.f32 1.0, %v381
      %v383 = vrcp.pop %v337
      %v384 = vmul.f32 %v337, %v383
      %v385 = vsub.f32 1.0, %v384
      %v386 = vmul.f32 %v383, %v385
      %v387 = vadd.f32 %v383, %v386
      %vm388 = vweird.f32 %v337
      %vm389 = vweird.f32 %v383
      %vm390 = vmor %vm388, %vm389
      %v391 = vsel %vm390, %v383, %v387
      %v392 = vand.u32 2147483647, %v337
      %vm393 = vcmp.eq.f32.partialorder %v392, 8.507059e+37
      %v394 = vand.u32 %v337, 2147483648
      %v395 = vor.u32 1.1754944e-38, %v394
      %v396 = vsel %vm393, %v395, %v391
      %v397 = vmul.f32 1.0, %v396
      %v398 = vmul.f32 %v198, %v352
      %v399 = vmul.f32 %v199, %v352
      %v400 = vmul.f32 %v200, %v367
      %v401 = vmul.f32 %v201, %v367
      %v402 = vmul.f32 %v202, %v382
      %v403 = vmul.f32 %v203, %v382
      %v404 = vmul.f32 %v204, %v397
      %v405 = vmul.f32 %v205, %v397
      %406 = vst [vmem:[%s197] sm:$0xff] %v398
      %407 = vst [vmem:[%s197 + $0x8] sm:$0xff] %v399
      %408 = vst [vmem:[%s197 + $0x10] sm:$0xff] %v400
      %409 = vst [vmem:[%s197 + $0x18] sm:$0xff] %v401
      %410 = vst [vmem:[%s197 + $0x20] sm:$0xff] %v402
      %411 = vst [vmem:[%s197 + $0x28] sm:$0xff] %v403
      %412 = vst [vmem:[%s197 + $0x30] sm:$0xff] %v404
      %413 = vst [vmem:[%s197 + $0x38] sm:$0xff] %v405
      %v414 = vadd.f32 %v398, %v400
      %v415 = vadd.f32 %v414, %v402
      %v416 = vadd.f32 %v415, %v404
      %v417 = vrot.slane %v416, 4
      %v418 = vadd.f32 %v416, %v417
      %v419 = vrot.slane %v418, 2
      %v420 = vadd.f32 %v418, %v419
      %v421 = vrot.slane %v420, 1
      %v422 = vadd.f32 %v420, %v421
      %v423 = vadd.f32 %v399, %v401
      %v424 = vadd.f32 %v423, %v403
      %v425 = vadd.f32 %v424, %v405
      %v426 = vrot.slane %v425, 4
      %v427 = vadd.f32 %v425, %v426
      %v428 = vrot.slane %v427, 2
      %v429 = vadd.f32 %v427, %v428
      %v430 = vrot.slane %v429, 1
      %v431 = vadd.f32 %v429, %v430
      %v432 = vrcp.pop 32.0
      %v433 = vmul.f32 32.0, %v432
      %v434 = vsub.f32 1.0, %v433
      %v435 = vmul.f32 %v432, %v434
      %v436 = vadd.f32 %v432, %v435
      %vm437 = vweird.f32 %v432
      %v438 = vsel %vm437, %v432, %v436
      %v439 = vmul.f32 %v422, %v438
      %v440 = vmul.f32 %v431, %v438
      %v441 = vmax.f32 %v398, %v402
      %v442 = vmax.f32 %v400, %v404
      %v443 = vmax.f32 %v441, %v442
      %v444 = vrot.slane %v443, 4
      %v445 = vmax.f32 %v443, %v444
      %v446 = vrot.slane %v445, 2
      %v447 = vmax.f32 %v445, %v446
      %v448 = vrot.slane %v447, 1
      %v449 = vmax.f32 %v447, %v448
      %v450 = vmax.f32 %v399, %v403
      %v451 = vmax.f32 %v401, %v405
      %v452 = vmax.f32 %v450, %v451
      %v453 = vrot.slane %v452, 4
      %v454 = vmax.f32 %v452, %v453
      %v455 = vrot.slane %v454, 2
      %v456 = vmax.f32 %v454, %v455
      %v457 = vrot.slane %v456, 1
      %v458 = vmax.f32 %v456, %v457
      %vm459 = vcmask 1040384
      %v460 = vsel %vm459, %v439, %v449
      %v461 = vsel %vm459, %v440, %v458
      %463 = vrot.lane.b32.xlu0 %v461, 48
      %v464 = vpop.permute.xlu0 %463
      %467 = vrot.lane.b32.xlu0 %v460, 48
      %v468 = vpop.permute.xlu0 %467
      %vm469 = vcmask 392192
      %v470 = vsel %vm469, %v468, %v464
      %v473 = vsel %vm469, %v464, %v468
      %474 = vrot.lane.b32.xlu0 %v461, 32
      %v475 = vpop.permute.xlu0 %474
      %477 = vrot.lane.b32.xlu0 %v460, 32
      %v478 = vpop.permute.xlu0 %477
      %vm479 = vcmask 261120
      %v480 = vsel %vm479, %v478, %v475
      %v482 = vsel %vm479, %v475, %v478
      %483 = vrot.lane.b32.xlu0 %v461, 16
      %v484 = vpop.permute.xlu0 %483
      %486 = vrot.lane.b32.xlu0 %v460, 16
      %v487 = vpop.permute.xlu0 %486
      %vm488 = vcmask 130048
      %v489 = vsel %vm488, %v487, %v484
      %v491 = vsel %vm488, %v484, %v487
      %492 = vrot.lane.b32.xlu0 %v460, 112
      %v493 = vpop.permute.xlu0 %492
      %494 = vrot.lane.b32.xlu0 %v461, 112
      %v495 = vpop.permute.xlu0 %494
      %vm496 = vcmask 916480
      %v497 = vsel %vm496, %v493, %v495
      %v501 = vsel %vm496, %v495, %v493
      %502 = vrot.lane.b32.xlu0 %v460, 96
      %v503 = vpop.permute.xlu0 %502
      %504 = vrot.lane.b32.xlu0 %v461, 96
      %v505 = vpop.permute.xlu0 %504
      %vm506 = vcmask 785408
      %v507 = vsel %vm506, %v503, %v505
      %v510 = vsel %vm506, %v505, %v503
      %511 = vrot.lane.b32.xlu0 %v460, 80
      %v512 = vpop.permute.xlu0 %511
      %513 = vrot.lane.b32.xlu0 %v461, 80
      %v514 = vpop.permute.xlu0 %513
      %vm515 = vcmask 654336
      %v516 = vsel %vm515, %v512, %v514
      %v519 = vsel %vm515, %v514, %v512
      %v521 = vrot.slane %v482, 6
      %v522 = vrot.slane %v480, 6
      %v526 = vrot.slane %v491, 4
      %v527 = vrot.slane %v489, 4
      %v530 = vrot.slane %v460, 2
      %v531 = vrot.slane %v461, 2
      %v535 = vrot.slane %v507, 6
      %v536 = vrot.slane %v510, 6
      %v540 = vrot.slane %v516, 4
      %v541 = vrot.slane %v519, 4
      %vm544 = vcmask 1041408
      %v545 = vsel %vm544, %v473, %v521
      %v546 = vsel %vm544, %v470, %v522
      %vm547 = vcmask 1043456
      %v548 = vsel %vm547, %v545, %v526
      %v549 = vsel %vm547, %v546, %v527
      %vm550 = vcmask 1045504
      %v551 = vsel %vm550, %v548, %v530
      %v552 = vsel %vm550, %v549, %v531
      %v553 = vsel %vm544, %v497, %v535
      %v554 = vsel %vm544, %v501, %v536
      %v555 = vsel %vm547, %v553, %v540
      %v556 = vsel %vm547, %v554, %v541
      %559 = vrot.lane.b32.xlu0 %v552, 3
      %v560 = vpop.permute.xlu0 %559
      %561 = vrot.lane.b32.xlu0 %v556, 3
      %v562 = vpop.permute.xlu0 %561
      %567 = vrot.lane.b32.xlu0 %v551, 3
      %v568 = vpop.permute.xlu0 %567
      %569 = vrot.lane.b32.xlu0 %v555, 3
      %v570 = vpop.permute.xlu0 %569
      %vm571 = vcmask 23552
      %v572 = vsel %vm571, %v568, %v560
      %v573 = vsel %vm571, %v570, %v562
      %v578 = vsel %vm571, %v560, %v568
      %v579 = vsel %vm571, %v562, %v570
      %v580 = vld [vmem:[%s3] sm:$0xff]
      %v581 = vld [vmem:[%s3 + $0x8] sm:$0xff]
      %v582 = vld [vmem:[%s3 + $0x10] sm:$0x3f]
      %v583 = vld [vmem:[%s3 + $0x18] sm:$0x3f]
      %v584 = vmul.f32 %v580, %v578
      %v585 = vmul.f32 %v581, %v572
      %v586 = vmul.f32 %v582, %v579
      %v587 = vmul.f32 %v583, %v573
      %v588 = vadd.f32 %v584, 0.0
      %v589 = vadd.f32 %v585, 0.0
      %v590 = vadd.f32 %v586, 0.0
      %v591 = vadd.f32 %v587, 0.0
      %592 = vrot.lane.b32.xlu0 %v552, 2
      %v593 = vpop.permute.xlu0 %592
      %594 = vrot.lane.b32.xlu0 %v556, 2
      %v595 = vpop.permute.xlu0 %594
      %598 = vrot.lane.b32.xlu0 %v551, 2
      %v599 = vpop.permute.xlu0 %598
      %600 = vrot.lane.b32.xlu0 %v555, 2
      %v601 = vpop.permute.xlu0 %600
      %v602 = vsel %vm253, %v599, %v593
      %v603 = vsel %vm253, %v601, %v595
      %v608 = vsel %vm253, %v593, %v599
      %v609 = vsel %vm253, %v595, %v601
      %s610 = scalar_lea.vmem %s3, 32
      %v611 = vld [vmem:[%s610] sm:$0xff]
      %v612 = vld [vmem:[%s610 + $0x8] sm:$0xff]
      %v613 = vld [vmem:[%s610 + $0x10] sm:$0x3f]
      %v614 = vld [vmem:[%s610 + $0x18] sm:$0x3f]
      %v615 = vmul.f32 %v611, %v608
      %v616 = vmul.f32 %v612, %v602
      %v617 = vmul.f32 %v613, %v609
      %v618 = vmul.f32 %v614, %v603
      %v619 = vadd.f32 %v588, %v615
      %v620 = vadd.f32 %v589, %v616
      %v621 = vadd.f32 %v590, %v617
      %v622 = vadd.f32 %v591, %v618
      %623 = vrot.lane.b32.xlu0 %v552, 1
      %v624 = vpop.permute.xlu0 %623
      %625 = vrot.lane.b32.xlu0 %v556, 1
      %v626 = vpop.permute.xlu0 %625
      %629 = vrot.lane.b32.xlu0 %v551, 1
      %v630 = vpop.permute.xlu0 %629
      %631 = vrot.lane.b32.xlu0 %v555, 1
      %v632 = vpop.permute.xlu0 %631
      %vm633 = vcmask 7168
      %v634 = vsel %vm633, %v630, %v624
      %v635 = vsel %vm633, %v632, %v626
      %v640 = vsel %vm633, %v624, %v630
      %v641 = vsel %vm633, %v626, %v632
      %s642 = scalar_lea.vmem %s3, 64
      %v643 = vld [vmem:[%s642] sm:$0xff]
      %v644 = vld [vmem:[%s642 + $0x8] sm:$0xff]
      %v645 = vld [vmem:[%s642 + $0x10] sm:$0x3f]
      %v646 = vld [vmem:[%s642 + $0x18] sm:$0x3f]
      %v647 = vmul.f32 %v643, %v640
      %v648 = vmul.f32 %v644, %v634
      %v649 = vmul.f32 %v645, %v641
      %v650 = vmul.f32 %v646, %v635
      %v651 = vadd.f32 %v619, %v647
      %v652 = vadd.f32 %v620, %v648
      %v653 = vadd.f32 %v621, %v649
      %v654 = vadd.f32 %v622, %v650
      %s655 = scalar_lea.vmem %s3, 96
      %v656 = vld [vmem:[%s655] sm:$0xff]
      %v657 = vld [vmem:[%s655 + $0x8] sm:$0xff]
      %v658 = vld [vmem:[%s655 + $0x10] sm:$0x3f]
      %v659 = vld [vmem:[%s655 + $0x18] sm:$0x3f]
      %v660 = vmul.f32 %v656, %v551
      %v661 = vmul.f32 %v657, %v552
      %v662 = vmul.f32 %v658, %v555
      %v663 = vmul.f32 %v659, %v556
      %v664 = vadd.f32 %v651, %v660
      %v665 = vadd.f32 %v652, %v661
      %v666 = vadd.f32 %v653, %v662
      %v667 = vadd.f32 %v654, %v663
      %668 = vrot.lane.b32.xlu0 %v551, 127
      %v669 = vpop.permute.xlu0 %668
      %670 = vrot.lane.b32.xlu0 %v552, 127
      %v671 = vpop.permute.xlu0 %670
      %672 = vrot.lane.b32.xlu0 %v555, 127
      %v673 = vpop.permute.xlu0 %672
      %674 = vrot.lane.b32.xlu0 %v556, 127
      %v675 = vpop.permute.xlu0 %674
      %vm676 = vcmask 1039360
      %v677 = vsel %vm676, %v669, %v671
      %v678 = vsel %vm676, %v673, %v675
      %v685 = vsel %vm676, %v671, %v669
      %v686 = vsel %vm676, %v675, %v673
      %s687 = scalar_lea.vmem %s3, 128
      %v688 = vld [vmem:[%s687] sm:$0xff]
      %v689 = vld [vmem:[%s687 + $0x8] sm:$0xff]
      %v690 = vld [vmem:[%s687 + $0x10] sm:$0x3f]
      %v691 = vld [vmem:[%s687 + $0x18] sm:$0x3f]
      %v692 = vmul.f32 %v688, %v677
      %v693 = vmul.f32 %v689, %v685
      %v694 = vmul.f32 %v690, %v678
      %v695 = vmul.f32 %v691, %v686
      %v696 = vadd.f32 %v664, %v692
      %v697 = vadd.f32 %v665, %v693
      %v698 = vadd.f32 %v666, %v694
      %v699 = vadd.f32 %v667, %v695
      %700 = vrot.lane.b32.xlu0 %v551, 126
      %v701 = vpop.permute.xlu0 %700
      %702 = vrot.lane.b32.xlu0 %v552, 126
      %v703 = vpop.permute.xlu0 %702
      %704 = vrot.lane.b32.xlu0 %v555, 126
      %v705 = vpop.permute.xlu0 %704
      %706 = vrot.lane.b32.xlu0 %v556, 126
      %v707 = vpop.permute.xlu0 %706
      %vm708 = vcmask 1031168
      %v709 = vsel %vm708, %v701, %v703
      %v710 = vsel %vm708, %v705, %v707
      %v717 = vsel %vm708, %v703, %v701
      %v718 = vsel %vm708, %v707, %v705
      %s719 = scalar_lea.vmem %s3, 160
      %v720 = vld [vmem:[%s719] sm:$0xff]
      %v721 = vld [vmem:[%s719 + $0x8] sm:$0xff]
      %v722 = vld [vmem:[%s719 + $0x10] sm:$0x3f]
      %v723 = vld [vmem:[%s719 + $0x18] sm:$0x3f]
      %v724 = vmul.f32 %v720, %v709
      %v725 = vmul.f32 %v721, %v717
      %v726 = vmul.f32 %v722, %v710
      %v727 = vmul.f32 %v723, %v718
      %v728 = vadd.f32 %v696, %v724
      %v729 = vadd.f32 %v697, %v725
      %v730 = vadd.f32 %v698, %v726
      %v731 = vadd.f32 %v699, %v727
      %732 = vrot.lane.b32.xlu0 %v551, 125
      %v733 = vpop.permute.xlu0 %732
      %734 = vrot.lane.b32.xlu0 %v552, 125
      %v735 = vpop.permute.xlu0 %734
      %736 = vrot.lane.b32.xlu0 %v555, 125
      %v737 = vpop.permute.xlu0 %736
      %738 = vrot.lane.b32.xlu0 %v556, 125
      %v739 = vpop.permute.xlu0 %738
      %vm740 = vcmask 1022976
      %v741 = vsel %vm740, %v733, %v735
      %v742 = vsel %vm740, %v737, %v739
      %v749 = vsel %vm740, %v735, %v733
      %v750 = vsel %vm740, %v739, %v737
      %s751 = scalar_lea.vmem %s3, 192
      %v752 = vld [vmem:[%s751] sm:$0xff]
      %v753 = vld [vmem:[%s751 + $0x8] sm:$0xff]
      %v754 = vld [vmem:[%s751 + $0x10] sm:$0x3f]
      %v755 = vld [vmem:[%s751 + $0x18] sm:$0x3f]
      %v756 = vmul.f32 %v752, %v741
      %v757 = vmul.f32 %v753, %v749
      %v758 = vmul.f32 %v754, %v742
      %v759 = vmul.f32 %v755, %v750
      %v760 = vadd.f32 %v728, %v756
      %v761 = vadd.f32 %v729, %v757
      %v762 = vadd.f32 %v730, %v758
      %v763 = vadd.f32 %v731, %v759
      %v764 = vsel %vm550, %v762, 0.0
      %v765 = vadd.f32 %v760, %v764
      %v766 = vrot.slane %v765, 4
      %v767 = vadd.f32 %v765, %v766
      %v768 = vrot.slane %v767, 2
      %v769 = vadd.f32 %v767, %v768
      %v770 = vrot.slane %v769, 1
      %v771 = vadd.f32 %v769, %v770
      %v772 = vsel %vm550, %v763, 0.0
      %v773 = vadd.f32 %v761, %v772
      %v774 = vrot.slane %v773, 4
      %v775 = vadd.f32 %v773, %v774
      %v776 = vrot.slane %v775, 2
      %v777 = vadd.f32 %v775, %v776
      %v778 = vrot.slane %v777, 1
      %v779 = vadd.f32 %v777, %v778
      %v780 = vxor.u32 %v771, 2147483648
      %v781 = vxor.u32 %v779, 2147483648
      %v782 = vmul.f32 %v780, 1.442695
      %v783 = vpow.pop %v782
      %v784 = vmul.f32 %v781, 1.442695
      %v785 = vpow.pop %v784
      %v786 = vadd.f32 %v783, 1.0
      %v787 = vadd.f32 %v785, 1.0
      %v788 = vrcp.pop %v786
      %v789 = vmul.f32 %v786, %v788
      %v790 = vsub.f32 1.0, %v789
      %v791 = vmul.f32 %v788, %v790
      %v792 = vadd.f32 %v788, %v791
      %vm793 = vweird.f32 %v786
      %vm794 = vweird.f32 %v788
      %vm795 = vmor %vm793, %vm794
      %v796 = vsel %vm795, %v788, %v792
      %v797 = vand.u32 2147483647, %v786
      %vm798 = vcmp.eq.f32.partialorder %v797, 8.507059e+37
      %v799 = vand.u32 %v786, 2147483648
      %v800 = vor.u32 1.1754944e-38, %v799
      %v801 = vsel %vm798, %v800, %v796
      %v802 = vmul.f32 1.0, %v801
      %v803 = vrcp.pop %v787
      %v804 = vmul.f32 %v787, %v803
      %v805 = vsub.f32 1.0, %v804
      %v806 = vmul.f32 %v803, %v805
      %v807 = vadd.f32 %v803, %v806
      %vm808 = vweird.f32 %v787
      %vm809 = vweird.f32 %v803
      %vm810 = vmor %vm808, %vm809
      %v811 = vsel %vm810, %v803, %v807
      %v812 = vand.u32 2147483647, %v787
      %vm813 = vcmp.eq.f32.partialorder %v812, 8.507059e+37
      %v814 = vand.u32 %v787, 2147483648
      %v815 = vor.u32 1.1754944e-38, %v814
      %v816 = vsel %vm813, %v815, %v811
      %v817 = vmul.f32 1.0, %v816
      %v818 = vld [vmem:[%s197] sm:$0xff]
      %v819 = vld [vmem:[%s197 + $0x8] sm:$0xff]
      %v820 = vld [vmem:[%s197 + $0x10] sm:$0xff]
      %v821 = vld [vmem:[%s197 + $0x18] sm:$0xff]
      %v822 = vld [vmem:[%s197 + $0x20] sm:$0xff]
      %v823 = vld [vmem:[%s197 + $0x28] sm:$0xff]
      %v824 = vld [vmem:[%s197 + $0x30] sm:$0xff]
      %v825 = vld [vmem:[%s197 + $0x38] sm:$0xff]
      %v826 = vmul.f32 %v818, %v802
      %v827 = vmul.f32 %v819, %v817
      %v828 = vmul.f32 %v820, %v802
      %v829 = vmul.f32 %v821, %v817
      %v830 = vmul.f32 %v822, %v802
      %v831 = vmul.f32 %v823, %v817
      %v832 = vmul.f32 %v824, %v802
      %v833 = vmul.f32 %v825, %v817
      %834 = vst [vmem:[%s197] sm:$0xff] %v826
      %835 = vst [vmem:[%s197 + $0x8] sm:$0xff] %v827
      %836 = vst [vmem:[%s197 + $0x10] sm:$0xff] %v828
      %837 = vst [vmem:[%s197 + $0x18] sm:$0xff] %v829
      %838 = vst [vmem:[%s197 + $0x20] sm:$0xff] %v830
      %839 = vst [vmem:[%s197 + $0x28] sm:$0xff] %v831
      %840 = vst [vmem:[%s197 + $0x30] sm:$0xff] %v832
      %841 = vst [vmem:[%s197 + $0x38] sm:$0xff] %v833
      %p842 = scmp.lt.s32.totalorder %s15, 1
      %s843 = scalar_select %p842, %s15, 1
      %s844 = smul.addr %s843, 8
      %s845 = smul.addr %s844, 8
      %s846 = scalar_lea.vmem %s4, %s845
      // Predicated region
      $region37: #{cbam_forward.1} parent=35 // pred_check
        %p847 = pneg %p122
      $region38: #{cbam_forward.1} parent=35 // pred_check_branch
        %849 = sbr.rel (%p847) target = $region40
      $region39: #{cbam_forward.1} parent=35 // pred_region
        _
      $region40: #{cbam_forward.1} parent=35 // pred_fallthru
        _
    $region36: #{cbam_forward.1} parent=5 // pred_fallthru
      _
    %p850 = scmp.le.s32.totalorder 2, %s10
    // Predicated region
    $region41: #{cbam_forward.1} parent=5 // pred_check
      %p851 = pneg %p850
    $region42: #{cbam_forward.1} parent=5 // pred_check_branch
      %853 = sbr.rel (%p851) target = $region44
    $region43: #{cbam_forward.1} parent=5 // pred_region
      %s854 = ssub.s32 %s10, 2
      // Predicated region
      $region45: #{cbam_forward.1} parent=43 // pred_check
        %p855 = pneg %p128
      $region46: #{cbam_forward.1} parent=43 // pred_check_branch
        %857 = sbr.rel (%p855) target = $region48
      $region47: #{cbam_forward.1} parent=43 // pred_region
        %p858 = scmp.lt.s32.totalorder %s16, 1
        %s859 = scalar_select %p858, %s16, 1
        %s860 = smul.addr %s859, 8
        %s861 = smul.addr %s860, 8
        %s862 = scalar_lea.vmem %s4, %s861
      $region48: #{cbam_forward.1} parent=43 // pred_fallthru
        _
    $region44: #{cbam_forward.1} parent=5 // pred_fallthru
      _
  $region6: #{cbam_forward.1} parent=0 // loop_footer
    %s14 = sadd.s32 1, %s10
  $region7: #{cbam_forward.1} parent=0 // loop_footer_branch
    %9 = sbr.rel target = $region3
  $region8: #{cbam_forward.1} parent=0 // loop_exit
    _

</llo_original>
